<compile_context>
chip_gen: v5e
topology: v5e:2x2
jax: 0.10.0
libtpu: 0.0.40
codegen_flags: <defaults>
</compile_context>

<pallas_src>
import math
import functools

import jax
import jax.numpy as jnp
from jax.experimental import pallas as pl
from jax.experimental.pallas import tpu as pltpu


def _lstm_cell_kernel(x_ref, h0_ref, c0_ref, w_ref, b_ref,
                      h1_ref, c1_ref, lhs_ref, *, input_size, hidden_size):
    I = input_size
    H = hidden_size

    # Build fused LHS [x, h0] in VMEM in the matmul dtype (single K=I+H pass).
    lhs_ref[:, :I] = x_ref[...].astype(lhs_ref.dtype)
    lhs_ref[:, I:] = h0_ref[...].astype(lhs_ref.dtype)

    # pre_gate = [x, h0] @ W + b, accumulated in f32 on the MXU.
    pre = jnp.dot(lhs_ref[...], w_ref[...], preferred_element_type=jnp.float32)
    pre = pre + b_ref[...].astype(jnp.float32)

    # Gate math in f32 (EUP/VPU fast path on all generations).
    # NOTE: these lane slices are free when H is a multiple of 128.
    f = jax.nn.sigmoid(pre[:, 0:H] + 1.0)
    i = 1.0 - f
    o = jax.nn.sigmoid(pre[:, H:2 * H])
    g = jnp.tanh(pre[:, 2 * H:3 * H])

    c0 = c0_ref[...].astype(jnp.float32)
    c1 = f * c0 + i * g
    h1 = o * jnp.tanh(c1)

    c1_ref[...] = c1.astype(c1_ref.dtype)
    h1_ref[...] = h1.astype(h1_ref.dtype)


def _round_up(x, m):
    return ((x + m - 1) // m) * m


def lstm_cell_forward(x, h0, c0, weight, bias, *, block_b=None,
                      matmul_dtype=jnp.bfloat16):
    """Pallas LSTMCell forward. Returns (h_1, c_1)."""
    B, I = x.shape
    H = h0.shape[1]
    assert weight.shape == (I + H, 3 * H)
    assert bias.shape == (3 * H,)

    # Batch tiling: favor MXU-friendly row counts; pad the tail instead of
    # silently dropping it.
    if block_b is None:
        block_b = 256 if B >= 256 else _round_up(B, 8)
    block_b = max(8, _round_up(block_b, 8))
    num_blocks = pl.cdiv(B, block_b)
    Bp = num_blocks * block_b
    if Bp != B:
        pad = ((0, Bp - B), (0, 0))
        x = jnp.pad(x, pad)
        h0 = jnp.pad(h0, pad)
        c0 = jnp.pad(c0, pad)

    mm_bytes = jnp.dtype(matmul_dtype).itemsize
    # Combined weight cast once (hoist this cast outside any scan over time).
    w_mm = weight.astype(matmul_dtype)
    b2d = bias.reshape(1, 3 * H).astype(jnp.float32)

    kernel = functools.partial(_lstm_cell_kernel, input_size=I, hidden_size=H)

    # VMEM budget: double-buffered activation/output tiles + (effectively
    # single-fetch but double-allocated) weight/bias blocks + LHS scratch +
    # f32 intermediates.
    w_bytes = (I + H) * 3 * H * mm_bytes
    act_bytes = block_b * (I + 3 * H) * x.dtype.itemsize
    out_bytes = block_b * 2 * H * x.dtype.itemsize
    bias_bytes = 3 * H * 4
    lhs_bytes = block_b * (I + H) * mm_bytes
    compute_bytes = block_b * 3 * H * 4 * 4
    est = 2 * (w_bytes + act_bytes + out_bytes + bias_bytes) + lhs_bytes + compute_bytes
    vmem_limit = int(min(64 * 2**20, max(32 * 2**20, est + 4 * 2**20)))

    cost = pl.CostEstimate(
        flops=2 * Bp * (I + H) * 3 * H,
        transcendentals=4 * Bp * H,
        bytes_accessed=w_bytes + act_bytes * num_blocks + out_bytes * num_blocks,
    )

    h1, c1 = pl.pallas_call(
        kernel,
        out_shape=(jax.ShapeDtypeStruct((Bp, H), x.dtype),
                   jax.ShapeDtypeStruct((Bp, H), x.dtype)),
        grid_spec=pltpu.PrefetchScalarGridSpec(
            num_scalar_prefetch=0,
            grid=(num_blocks,),
            in_specs=[
                pl.BlockSpec((block_b, I), lambda b: (b, 0)),        # x
                pl.BlockSpec((block_b, H), lambda b: (b, 0)),        # h0
                pl.BlockSpec((block_b, H), lambda b: (b, 0)),        # c0
                pl.BlockSpec((I + H, 3 * H), lambda b: (0, 0)),      # W (invariant)
                pl.BlockSpec((1, 3 * H), lambda b: (0, 0)),          # bias (invariant)
            ],
            out_specs=[
                pl.BlockSpec((block_b, H), lambda b: (b, 0)),        # h1
                pl.BlockSpec((block_b, H), lambda b: (b, 0)),        # c1
            ],
            scratch_shapes=[pltpu.VMEM((block_b, I + H), matmul_dtype)],
        ),
        compiler_params=pltpu.CompilerParams(
            dimension_semantics=("parallel",),
            vmem_limit_bytes=vmem_limit),
        cost_estimate=cost,
    )(x, h0, c0, w_mm, b2d)

    if Bp != B:
        h1 = h1[:B]
        c1 = c1[:B]
    return h1, c1


def lstm_cell_reference(x, h0, c0, weight, bias, *, matmul_dtype=None):
    """Pure-JAX reference matching the (intended) torch semantics.

    If matmul_dtype is given, the matmul operands are cast like the kernel
    does (bf16 in, f32 accumulate) so the comparison is apples-to-apples.
    """
    H = h0.shape[1]
    lhs = jnp.concatenate([x, h0], axis=1)
    w = weight
    if matmul_dtype is not None:
        lhs = lhs.astype(matmul_dtype)
        w = w.astype(matmul_dtype)
    pre = jnp.dot(lhs, w, preferred_element_type=jnp.float32)
    pre = pre + bias.astype(jnp.float32)
    f_pre, o_pre, g_pre = pre[:, :H], pre[:, H:2 * H], pre[:, 2 * H:]
    f = jax.nn.sigmoid(f_pre + 1.0)
    i = 1.0 - f
    o = jax.nn.sigmoid(o_pre)
    g = jnp.tanh(g_pre)
    c1 = f * c0.astype(jnp.float32) + i * g
    h1 = o * jnp.tanh(c1)
    return h1.astype(x.dtype), c1.astype(x.dtype)


if __name__ == "__main__":
    # Small shapes consistent with the module's forward (lane-aligned H, I).
    batch = 8
    input_size = 128
    hidden_size = 128
    dtype = jnp.float32

    key = jax.random.PRNGKey(0)
    kx, kh, kc, kw, kb = jax.random.split(key, 5)

    # Deterministic parameter init mirroring reset_parameters():
    # uniform(-stdv, stdv) with stdv = 1/sqrt(hidden_size).
    stdv = 1.0 / math.sqrt(hidden_size)
    weight = jax.random.uniform(kw, (input_size + hidden_size, 3 * hidden_size),
                                dtype=dtype, minval=-stdv, maxval=stdv)
    bias = jax.random.uniform(kb, (3 * hidden_size,), dtype=dtype,
                              minval=-stdv, maxval=stdv)

    x = jax.random.normal(kx, (batch, input_size), dtype=dtype)
    h0 = jax.random.normal(kh, (batch, hidden_size), dtype=dtype)
    c0 = jax.random.normal(kc, (batch, hidden_size), dtype=dtype)

    fwd = jax.jit(lstm_cell_forward)

    h1, c1 = fwd(x, h0, c0, weight, bias)
    jax.block_until_ready((h1, c1))

    # Matched-precision reference (bf16 matmul operands, f32 accumulation).
    h1_mr, c1_mr = lstm_cell_reference(x, h0, c0, weight, bias,
                                       matmul_dtype=jnp.bfloat16)
    assert jnp.allclose(h1, h1_mr, atol=1e-4, rtol=1e-4), "h mismatch (bf16 ref)"
    assert jnp.allclose(c1, c1_mr, atol=1e-4, rtol=1e-4), "c mismatch (bf16 ref)"

    # Loose check against the pure-f32 reference (bf16 quantization error only).
    h1_fr, c1_fr = lstm_cell_reference(x, h0, c0, weight, bias)
    assert jnp.allclose(h1, h1_fr, atol=3e-2, rtol=3e-2), "h mismatch (f32 ref)"
    assert jnp.allclose(c1, c1_fr, atol=3e-2, rtol=3e-2), "c mismatch (f32 ref)"

    # hx=None path (zero initial state), as in the torch forward.
    zeros = jnp.zeros((batch, hidden_size), dtype=dtype)
    h1z, c1z = fwd(x, zeros, zeros, weight, bias)
    jax.block_until_ready((h1z, c1z))
    h1z_ref, c1z_ref = lstm_cell_reference(x, zeros, zeros, weight, bias,
                                           matmul_dtype=jnp.bfloat16)
    assert jnp.allclose(h1z, h1z_ref, atol=1e-4, rtol=1e-4)
    assert jnp.allclose(c1z, c1z_ref, atol=1e-4, rtol=1e-4)

    # Ragged batch (exercises the cdiv + tail-padding path).
    batch2 = 10
    x2 = jax.random.normal(kx, (batch2, input_size), dtype=dtype)
    h02 = jax.random.normal(kh, (batch2, hidden_size), dtype=dtype)
    c02 = jax.random.normal(kc, (batch2, hidden_size), dtype=dtype)
    h12, c12 = jax.jit(lstm_cell_forward)(x2, h02, c02, weight, bias)
    jax.block_until_ready((h12, c12))
    h12_ref, c12_ref = lstm_cell_reference(x2, h02, c02, weight, bias,
                                           matmul_dtype=jnp.bfloat16)
    assert h12.shape == (batch2, hidden_size)
    assert jnp.allclose(h12, h12_ref, atol=1e-4, rtol=1e-4)
    assert jnp.allclose(c12, c12_ref, atol=1e-4, rtol=1e-4)

    print("KERNEL_OK")
</pallas_src>

<mosaic_0001>
module attributes {stable_mosaic.version = 11 : i64} {
  func.func @_lstm_cell_kernel(%arg0: i32, %arg1: memref<8x128xf32, #tpu.memory_space<vmem>>, %arg2: memref<8x128xf32, #tpu.memory_space<vmem>>, %arg3: memref<8x128xf32, #tpu.memory_space<vmem>>, %arg4: memref<256x384xbf16, #tpu.memory_space<vmem>>, %arg5: memref<1x384xf32, #tpu.memory_space<vmem>>, %arg6: memref<8x128xf32, #tpu.memory_space<vmem>>, %arg7: memref<8x128xf32, #tpu.memory_space<vmem>>, %arg8: memref<8x256xbf16, #tpu.memory_space<vmem>>) attributes {dimension_semantics = [#tpu.dimension_semantics<parallel>], iteration_bounds = array<i64: 1>, scalar_prefetch = 0 : i64, scratch_operands = 1 : i64, tpu.core_type = #tpu.core_type<tc>, window_params = [{transform_indices = @transform_0, window_bounds = array<i64: 8, 128>}, {transform_indices = @transform_1, window_bounds = array<i64: 8, 128>}, {transform_indices = @transform_2, window_bounds = array<i64: 8, 128>}, {pipeline_mode = #tpu.pipeline_mode<synchronous>, transform_indices = @transform_3, window_bounds = array<i64: 256, 384>}, {pipeline_mode = #tpu.pipeline_mode<synchronous>, transform_indices = @transform_4, window_bounds = array<i64: 1, 384>}, {transform_indices = @transform_5, window_bounds = array<i64: 8, 128>}, {transform_indices = @transform_6, window_bounds = array<i64: 8, 128>}]} {
    %c0 = arith.constant 0 : index
    %c0_0 = arith.constant 0 : index
    %0 = vector.load %arg1[%c0, %c0_0] : memref<8x128xf32, #tpu.memory_space<vmem>>, vector<8x128xf32>
    %1 = arith.truncf %0 : vector<8x128xf32> to vector<8x128xbf16>
    %c0_1 = arith.constant 0 : index
    %c0_2 = arith.constant 0 : index
    %2 = vector.load %arg8[%c0_1, %c0_2] : memref<8x256xbf16, #tpu.memory_space<vmem>>, vector<8x128xbf16>
    tpu.vector_store %arg8[%c0_1, %c0_2], %1 {strides = array<i32>} : memref<8x256xbf16, #tpu.memory_space<vmem>>, vector<8x128xbf16>,
    %c0_3 = arith.constant 0 : index
    %c0_4 = arith.constant 0 : index
    %3 = vector.load %arg2[%c0_3, %c0_4] : memref<8x128xf32, #tpu.memory_space<vmem>>, vector<8x128xf32>
    %4 = arith.truncf %3 : vector<8x128xf32> to vector<8x128xbf16>
    %c0_5 = arith.constant 0 : index
    %c128 = arith.constant 128 : index
    %5 = vector.load %arg8[%c0_5, %c128] : memref<8x256xbf16, #tpu.memory_space<vmem>>, vector<8x128xbf16>
    tpu.vector_store %arg8[%c0_5, %c128], %4 {strides = array<i32>} : memref<8x256xbf16, #tpu.memory_space<vmem>>, vector<8x128xbf16>,
    %c0_6 = arith.constant 0 : index
    %c0_7 = arith.constant 0 : index
    %6 = vector.load %arg8[%c0_6, %c0_7] : memref<8x256xbf16, #tpu.memory_space<vmem>>, vector<8x256xbf16>
    %c0_8 = arith.constant 0 : index
    %c0_9 = arith.constant 0 : index
    %7 = vector.load %arg4[%c0_8, %c0_9] : memref<256x384xbf16, #tpu.memory_space<vmem>>, vector<256x384xbf16>
    %cst = arith.constant dense<0.000000e+00> : vector<8x384xf32>
    %8 = tpu.matmul %6, %7, %cst {dimension_numbers = #tpu.dot_dimension_numbers<[1], [0], [0], [1], [0, 0, 1, 1], [], []>} : vector<8x256xbf16>, vector<256x384xbf16>, vector<8x384xf32> -> vector<8x384xf32>
    %c0_10 = arith.constant 0 : index
    %c0_11 = arith.constant 0 : index
    %9 = vector.load %arg5[%c0_10, %c0_11] : memref<1x384xf32, #tpu.memory_space<vmem>>, vector<1x384xf32>
    %10 = vector.broadcast %9 : vector<1x384xf32> to vector<8x384xf32>
    %11 = arith.addf %8, %10 : vector<8x384xf32>
    %12 = vector.extract_strided_slice %11 {offsets = [0, 0], sizes = [8, 128], strides = [1, 1]} : vector<8x384xf32> to vector<8x128xf32>
    %cst_12 = arith.constant 1.000000e+00 : f32
    %13 = vector.broadcast %cst_12 : f32 to vector<8x128xf32>
    %14 = arith.addf %12, %13 : vector<8x128xf32>
    %15 = arith.negf %14 : vector<8x128xf32>
    %16 = math.exp %15 : vector<8x128xf32>
    %cst_13 = arith.constant 1.000000e+00 : f32
    %17 = vector.broadcast %cst_13 : f32 to vector<8x128xf32>
    %18 = arith.addf %17, %16 : vector<8x128xf32>
    %19 = arith.divf %17, %18 : vector<8x128xf32>
    %cst_14 = arith.constant 1.000000e+00 : f32
    %20 = vector.broadcast %cst_14 : f32 to vector<8x128xf32>
    %21 = arith.subf %20, %19 : vector<8x128xf32>
    %22 = vector.extract_strided_slice %11 {offsets = [0, 128], sizes = [8, 128], strides = [1, 1]} : vector<8x384xf32> to vector<8x128xf32>
    %23 = arith.negf %22 : vector<8x128xf32>
    %24 = math.exp %23 : vector<8x128xf32>
    %cst_15 = arith.constant 1.000000e+00 : f32
    %25 = vector.broadcast %cst_15 : f32 to vector<8x128xf32>
    %26 = arith.addf %25, %24 : vector<8x128xf32>
    %27 = arith.divf %25, %26 : vector<8x128xf32>
    %28 = vector.extract_strided_slice %11 {offsets = [0, 256], sizes = [8, 128], strides = [1, 1]} : vector<8x384xf32> to vector<8x128xf32>
    %29 = math.tanh %28 : vector<8x128xf32>
    %c0_16 = arith.constant 0 : index
    %c0_17 = arith.constant 0 : index
    %30 = vector.load %arg3[%c0_16, %c0_17] : memref<8x128xf32, #tpu.memory_space<vmem>>, vector<8x128xf32>
    %31 = arith.mulf %19, %30 : vector<8x128xf32>
    %32 = arith.mulf %21, %29 : vector<8x128xf32>
    %33 = arith.addf %31, %32 : vector<8x128xf32>
    %34 = math.tanh %33 : vector<8x128xf32>
    %35 = arith.mulf %27, %34 : vector<8x128xf32>
    %c0_18 = arith.constant 0 : index
    %c0_19 = arith.constant 0 : index
    %36 = vector.load %arg7[%c0_18, %c0_19] : memref<8x128xf32, #tpu.memory_space<vmem>>, vector<8x128xf32>
    tpu.vector_store %arg7[%c0_18, %c0_19], %33 {strides = array<i32>} : memref<8x128xf32, #tpu.memory_space<vmem>>, vector<8x128xf32>,
    %c0_20 = arith.constant 0 : index
    %c0_21 = arith.constant 0 : index
    %37 = vector.load %arg6[%c0_20, %c0_21] : memref<8x128xf32, #tpu.memory_space<vmem>>, vector<8x128xf32>
    tpu.vector_store %arg6[%c0_20, %c0_21], %35 {strides = array<i32>} : memref<8x128xf32, #tpu.memory_space<vmem>>, vector<8x128xf32>,
    return
  }
  func.func @transform_0(%arg0: i32) -> (i32, i32) {
    %c0_i32 = arith.constant 0 : i32
    %c0_i32_0 = arith.constant 0 : i32
    return %arg0, %c0_i32 : i32, i32
  }
  func.func @transform_1(%arg0: i32) -> (i32, i32) {
    %c0_i32 = arith.constant 0 : i32
    %c0_i32_0 = arith.constant 0 : i32
    return %arg0, %c0_i32 : i32, i32
  }
  func.func @transform_2(%arg0: i32) -> (i32, i32) {
    %c0_i32 = arith.constant 0 : i32
    %c0_i32_0 = arith.constant 0 : i32
    return %arg0, %c0_i32 : i32, i32
  }
  func.func @transform_3(%arg0: i32) -> (i32, i32) {
    %c0_i32 = arith.constant 0 : i32
    %c0_i32_0 = arith.constant 0 : i32
    %c0_i32_1 = arith.constant 0 : i32
    return %c0_i32, %c0_i32_0 : i32, i32
  }
  func.func @transform_4(%arg0: i32) -> (i32, i32) {
    %c0_i32 = arith.constant 0 : i32
    %c0_i32_0 = arith.constant 0 : i32
    %c0_i32_1 = arith.constant 0 : i32
    return %c0_i32, %c0_i32_0 : i32, i32
  }
  func.func @transform_5(%arg0: i32) -> (i32, i32) {
    %c0_i32 = arith.constant 0 : i32
    %c0_i32_0 = arith.constant 0 : i32
    return %arg0, %c0_i32 : i32, i32
  }
  func.func @transform_6(%arg0: i32) -> (i32, i32) {
    %c0_i32 = arith.constant 0 : i32
    %c0_i32_0 = arith.constant 0 : i32
    return %arg0, %c0_i32 : i32, i32
  }
}

</mosaic_0001>

<llo_original>
// kernel: lstm_cell_forward.1
$region0: #{lstm_cell_forward.1}
  #allocation0 [shape = 'u32[]', space=smem, size = 0x4, offset = 0x4, fixed_abs, tag = 'smem constant byte address 0x4 - core index']
  #allocation1 [shape = 'u32[72,128]{1,0:T(1,128)}', space=vmem, size = 0x9000, scoped, tag = 'internal scratch']
  #allocation2 [shape = 'bf16[8,256]{1,0:T(8,128)(2,1)}', space=vmem, size = 0x1000, scoped, tag = 'scratch operand']
  %s0 = inlined_call_operand.vmem [shape: f32[8,128], index: 0, kind: input, shape index: {}]
  %s1 = inlined_call_operand.vmem [shape: f32[8,128], index: 1, kind: input, shape index: {}]
  %s2 = inlined_call_operand.vmem [shape: f32[8,128], index: 2, kind: input, shape index: {}]
  %s3 = inlined_call_operand.vmem [shape: bf16[256,384], index: 3, kind: input, shape index: {}]
  %s4 = inlined_call_operand.vmem [shape: f32[1,384], index: 4, kind: input, shape index: {}]
  %s5 = inlined_call_operand.hbm [shape: f32[8,128], index: 5, kind: output, shape index: {0}]
  %s6 = inlined_call_operand.hbm [shape: f32[8,128], index: 6, kind: output, shape index: {1}]
  %7 = xla_tuple %s5, %s6
  %s8 = sld [smem:[#allocation0]]
  $region38: #{lstm_cell_forward.1} parent=0
    _
  %s10 = ssub.s32 1, %s8
  %s11 = scalar_select 0, %s10, %s8
  $region1: #{lstm_cell_forward.1} parent=0
    #allocation3 [shape = 'u8[4096]{0}', space=vmem, size = 0x1000, scoped, tag = 'output window, operand 0, single buffered']
    #allocation4 [shape = 's32[1]{0}', space=sflag, size = 0x4, scoped, tag = 'scoped memory for lstm_cell_forward.1']
    #allocation5 [shape = 'u8[4096]{0}', space=vmem, size = 0x1000, scoped, tag = 'output window, operand 1, single buffered']
    #allocation6 [shape = 's32[1]{0}', space=sflag, size = 0x4, scoped, tag = 'scoped memory for lstm_cell_forward.1']
    %12 = vsyncpa [#allocation4], 0
    %13 = vsyncpa [#allocation6], 0
    // Predicated region
    $region2: #{lstm_cell_forward.1} parent=1 // pred_check
      _
    $region3: #{lstm_cell_forward.1} parent=1 // pred_check_branch
      %15 = sbr.rel (0) target = $region5
    $region4: #{lstm_cell_forward.1} parent=1 // pred_region
      _
    $region5: #{lstm_cell_forward.1} parent=1 // pred_fallthru
      _
    // Predicated region
    $region6: #{lstm_cell_forward.1} parent=1 // pred_check
      _
    $region7: #{lstm_cell_forward.1} parent=1 // pred_check_branch
      %17 = sbr.rel (0) target = $region9
    $region8: #{lstm_cell_forward.1} parent=1 // pred_region
      _
    $region9: #{lstm_cell_forward.1} parent=1 // pred_fallthru
      _
    // Predicated region
    $region10: #{lstm_cell_forward.1} parent=1 // pred_check
      _
    $region11: #{lstm_cell_forward.1} parent=1 // pred_check_branch
      %19 = sbr.rel (0) target = $region13
    $region12: #{lstm_cell_forward.1} parent=1 // pred_region
      _
    $region13: #{lstm_cell_forward.1} parent=1 // pred_fallthru
      _
    // Predicated region
    $region14: #{lstm_cell_forward.1} parent=1 // pred_check
      _
    $region15: #{lstm_cell_forward.1} parent=1 // pred_check_branch
      %21 = sbr.rel (0) target = $region17
    $region16: #{lstm_cell_forward.1} parent=1 // pred_region
      _
    $region17: #{lstm_cell_forward.1} parent=1 // pred_fallthru
      _
    // Predicated region
    $region18: #{lstm_cell_forward.1} parent=1 // pred_check
      _
    $region19: #{lstm_cell_forward.1} parent=1 // pred_check_branch
      %23 = sbr.rel (0) target = $region21
    $region20: #{lstm_cell_forward.1} parent=1 // pred_region
      _
    $region21: #{lstm_cell_forward.1} parent=1 // pred_fallthru
      _
    %v24 = vld [vmem:[%s0] sm:$0xff]
    %v25 = vpack.c.bf16 %v24, %v24
    %26 = vst [vmem:[#allocation2] sm:$0xf] %v25
    %v27 = vld [vmem:[%s1] sm:$0xff]
    %v28 = vpack.c.bf16 %v27, %v27
    %29 = vst [vmem:[#allocation2 + $0x4] sm:$0xf] %v28
    %v30 = vld [vmem:[#allocation2] sm:$0xff]
    %v31 = vld [vmem:[%s3] sm:$0xff]
    %v32 = vld [vmem:[%s3 + $0x8] sm:$0xf]
    %v33 = vld [vmem:[%s3 + $0xc] sm:$0xff]
    %v34 = vld [vmem:[%s3 + $0x14] sm:$0xf]
    %v35 = vld [vmem:[%s3 + $0x18] sm:$0xff]
    %v36 = vld [vmem:[%s3 + $0x20] sm:$0xf]
    %v37 = vld [vmem:[%s3 + $0x24] sm:$0xff]
    %v38 = vld [vmem:[%s3 + $0x2c] sm:$0xf]
    %v39 = vld [vmem:[%s3 + $0x30] sm:$0xff]
    %v40 = vld [vmem:[%s3 + $0x38] sm:$0xf]
    %v41 = vld [vmem:[%s3 + $0x3c] sm:$0xff]
    %v42 = vld [vmem:[%s3 + $0x44] sm:$0xf]
    %v43 = vld [vmem:[%s3 + $0x48] sm:$0xff]
    %v44 = vld [vmem:[%s3 + $0x50] sm:$0xf]
    %v45 = vld [vmem:[%s3 + $0x54] sm:$0xff]
    %v46 = vld [vmem:[%s3 + $0x5c] sm:$0xf]
    %v47 = vld [vmem:[%s3 + $0x60] sm:$0xff]
    %v48 = vld [vmem:[%s3 + $0x68] sm:$0xf]
    %v49 = vld [vmem:[%s3 + $0x6c] sm:$0xff]
    %v50 = vld [vmem:[%s3 + $0x74] sm:$0xf]
    %v51 = vld [vmem:[%s3 + $0x78] sm:$0xff]
    %v52 = vld [vmem:[%s3 + $0x80] sm:$0xf]
    %v53 = vld [vmem:[%s3 + $0x84] sm:$0xff]
    %v54 = vld [vmem:[%s3 + $0x8c] sm:$0xf]
    %v55 = vld [vmem:[%s3 + $0x90] sm:$0xff]
    %v56 = vld [vmem:[%s3 + $0x98] sm:$0xf]
    %v57 = vld [vmem:[%s3 + $0x9c] sm:$0xff]
    %v58 = vld [vmem:[%s3 + $0xa4] sm:$0xf]
    %v59 = vld [vmem:[%s3 + $0xa8] sm:$0xff]
    %v60 = vld [vmem:[%s3 + $0xb0] sm:$0xf]
    %v61 = vld [vmem:[%s3 + $0xb4] sm:$0xff]
    %v62 = vld [vmem:[%s3 + $0xbc] sm:$0xf]
    %v63 = vld [vmem:[%s3 + $0xc0] sm:$0xff]
    %v64 = vld [vmem:[%s3 + $0xc8] sm:$0xf]
    %v65 = vld [vmem:[%s3 + $0xcc] sm:$0xff]
    %v66 = vld [vmem:[%s3 + $0xd4] sm:$0xf]
    %v67 = vld [vmem:[%s3 + $0xd8] sm:$0xff]
    %v68 = vld [vmem:[%s3 + $0xe0] sm:$0xf]
    %v69 = vld [vmem:[%s3 + $0xe4] sm:$0xff]
    %v70 = vld [vmem:[%s3 + $0xec] sm:$0xf]
    %v71 = vld [vmem:[%s3 + $0xf0] sm:$0xff]
    %v72 = vld [vmem:[%s3 + $0xf8] sm:$0xf]
    %v73 = vld [vmem:[%s3 + $0xfc] sm:$0xff]
    %v74 = vld [vmem:[%s3 + $0x104] sm:$0xf]
    %v75 = vld [vmem:[%s3 + $0x108] sm:$0xff]
    %v76 = vld [vmem:[%s3 + $0x110] sm:$0xf]
    %v77 = vld [vmem:[%s3 + $0x114] sm:$0xff]
    %v78 = vld [vmem:[%s3 + $0x11c] sm:$0xf]
    %v79 = vld [vmem:[%s3 + $0x120] sm:$0xff]
    %v80 = vld [vmem:[%s3 + $0x128] sm:$0xf]
    %v81 = vld [vmem:[%s3 + $0x12c] sm:$0xff]
    %v82 = vld [vmem:[%s3 + $0x134] sm:$0xf]
    %v83 = vld [vmem:[%s3 + $0x138] sm:$0xff]
    %v84 = vld [vmem:[%s3 + $0x140] sm:$0xf]
    %v85 = vld [vmem:[%s3 + $0x144] sm:$0xff]
    %v86 = vld [vmem:[%s3 + $0x14c] sm:$0xf]
    %v87 = vld [vmem:[%s3 + $0x150] sm:$0xff]
    %v88 = vld [vmem:[%s3 + $0x158] sm:$0xf]
    %v89 = vld [vmem:[%s3 + $0x15c] sm:$0xff]
    %v90 = vld [vmem:[%s3 + $0x164] sm:$0xf]
    %v91 = vld [vmem:[%s3 + $0x168] sm:$0xff]
    %v92 = vld [vmem:[%s3 + $0x170] sm:$0xf]
    %v93 = vld [vmem:[%s3 + $0x174] sm:$0xff]
    %v94 = vld [vmem:[%s3 + $0x17c] sm:$0xf]
    %v95 = vld [vmem:[%s4] sm:$0x7]
    %v97 = vperm.slane %v95, 0
    %v98 = vperm.slane %v95, 1
    %v99 = vperm.slane %v95, 2
    %v104 = vunpack.c.l.b16 %v30
    %v105 = vunpack.c.h.b16 %v30
    %v106 = vpack.c.b16 %v104, %v104
    %v107 = vpack.c.b16 %v105, %v105
    %v174 = vunpack.c.l.b16 %v31
    %v175 = vunpack.c.h.b16 %v31
    %v176 = vunpack.c.l.b16 %v32
    %v177 = vunpack.c.l.b16 %v33
    %v178 = vunpack.c.h.b16 %v33
    %v179 = vunpack.c.l.b16 %v34
    %v180 = vunpack.c.l.b16 %v35
    %v181 = vunpack.c.h.b16 %v35
    %v182 = vunpack.c.l.b16 %v36
    %v183 = vunpack.c.l.b16 %v37
    %v184 = vunpack.c.h.b16 %v37
    %v185 = vunpack.c.l.b16 %v38
    %v186 = vunpack.c.l.b16 %v39
    %v187 = vunpack.c.h.b16 %v39
    %v188 = vunpack.c.l.b16 %v40
    %v189 = vunpack.c.l.b16 %v41
    %v190 = vunpack.c.h.b16 %v41
    %v191 = vunpack.c.l.b16 %v42
    %v192 = vunpack.c.l.b16 %v43
    %v193 = vunpack.c.h.b16 %v43
    %v194 = vunpack.c.l.b16 %v44
    %v195 = vunpack.c.l.b16 %v45
    %v196 = vunpack.c.h.b16 %v45
    %v197 = vunpack.c.l.b16 %v46
    %v198 = vunpack.c.l.b16 %v47
    %v199 = vunpack.c.h.b16 %v47
    %v200 = vunpack.c.l.b16 %v48
    %v201 = vunpack.c.l.b16 %v49
    %v202 = vunpack.c.h.b16 %v49
    %v203 = vunpack.c.l.b16 %v50
    %v204 = vunpack.c.l.b16 %v51
    %v205 = vunpack.c.h.b16 %v51
    %v206 = vunpack.c.l.b16 %v52
    %v207 = vunpack.c.l.b16 %v53
    %v208 = vunpack.c.h.b16 %v53
    %v209 = vunpack.c.l.b16 %v54
    %v210 = vunpack.c.l.b16 %v55
    %v211 = vunpack.c.h.b16 %v55
    %v212 = vunpack.c.l.b16 %v56
    %v213 = vunpack.c.l.b16 %v57
    %v214 = vunpack.c.h.b16 %v57
    %v215 = vunpack.c.l.b16 %v58
    %v216 = vunpack.c.l.b16 %v59
    %v217 = vunpack.c.h.b16 %v59
    %v218 = vunpack.c.l.b16 %v60
    %v219 = vunpack.c.l.b16 %v61
    %v220 = vunpack.c.h.b16 %v61
    %v221 = vunpack.c.l.b16 %v62
    %v222 = vunpack.c.l.b16 %v63
    %v223 = vunpack.c.h.b16 %v63
    %v224 = vunpack.c.l.b16 %v64
    %v225 = vunpack.c.l.b16 %v65
    %v226 = vunpack.c.h.b16 %v65
    %v227 = vunpack.c.l.b16 %v66
    %v228 = vunpack.c.l.b16 %v67
    %v229 = vunpack.c.h.b16 %v67
    %v230 = vunpack.c.l.b16 %v68
    %v231 = vunpack.c.l.b16 %v69
    %v232 = vunpack.c.h.b16 %v69
    %v233 = vunpack.c.l.b16 %v70
    %v234 = vunpack.c.l.b16 %v71
    %v235 = vunpack.c.h.b16 %v71
    %v236 = vunpack.c.l.b16 %v72
    %v237 = vunpack.c.l.b16 %v73
    %v238 = vunpack.c.h.b16 %v73
    %v239 = vunpack.c.l.b16 %v74
    %v240 = vunpack.c.l.b16 %v75
    %v241 = vunpack.c.h.b16 %v75
    %v242 = vunpack.c.l.b16 %v76
    %v243 = vunpack.c.l.b16 %v77
    %v244 = vunpack.c.h.b16 %v77
    %v245 = vunpack.c.l.b16 %v78
    %v246 = vunpack.c.l.b16 %v79
    %v247 = vunpack.c.h.b16 %v79
    %v248 = vunpack.c.l.b16 %v80
    %v249 = vunpack.c.l.b16 %v81
    %v250 = vunpack.c.h.b16 %v81
    %v251 = vunpack.c.l.b16 %v82
    %v252 = vunpack.c.l.b16 %v83
    %v253 = vunpack.c.h.b16 %v83
    %v254 = vunpack.c.l.b16 %v84
    %v255 = vunpack.c.l.b16 %v85
    %v256 = vunpack.c.h.b16 %v85
    %v257 = vunpack.c.l.b16 %v86
    %v258 = vunpack.c.l.b16 %v87
    %v259 = vunpack.c.h.b16 %v87
    %v260 = vunpack.c.l.b16 %v88
    %v261 = vunpack.c.l.b16 %v89
    %v262 = vunpack.c.h.b16 %v89
    %v263 = vunpack.c.l.b16 %v90
    %v264 = vunpack.c.l.b16 %v91
    %v265 = vunpack.c.h.b16 %v91
    %v266 = vunpack.c.l.b16 %v92
    %v267 = vunpack.c.l.b16 %v93
    %v268 = vunpack.c.h.b16 %v93
    %v269 = vunpack.c.l.b16 %v94
    %v270 = vpack.c.b16 %v177, %v174
    %v271 = vpack.c.b16 %v178, %v175
    %v272 = vpack.c.b16 %v179, %v176
    %v273 = vpack.c.b16 %v183, %v180
    %v274 = vpack.c.b16 %v184, %v181
    %v275 = vpack.c.b16 %v185, %v182
    %v276 = vpack.c.b16 %v189, %v186
    %v277 = vpack.c.b16 %v190, %v187
    %v278 = vpack.c.b16 %v191, %v188
    %v279 = vpack.c.b16 %v195, %v192
    %v280 = vpack.c.b16 %v196, %v193
    %v281 = vpack.c.b16 %v197, %v194
    %v282 = vpack.c.b16 %v201, %v198
    %v283 = vpack.c.b16 %v202, %v199
    %v284 = vpack.c.b16 %v203, %v200
    %v285 = vpack.c.b16 %v207, %v204
    %v286 = vpack.c.b16 %v208, %v205
    %v287 = vpack.c.b16 %v209, %v206
    %v288 = vpack.c.b16 %v213, %v210
    %v289 = vpack.c.b16 %v214, %v211
    %v290 = vpack.c.b16 %v215, %v212
    %v291 = vpack.c.b16 %v219, %v216
    %v292 = vpack.c.b16 %v220, %v217
    %v293 = vpack.c.b16 %v221, %v218
    %v294 = vpack.c.b16 %v225, %v222
    %v295 = vpack.c.b16 %v226, %v223
    %v296 = vpack.c.b16 %v227, %v224
    %v297 = vpack.c.b16 %v231, %v228
    %v298 = vpack.c.b16 %v232, %v229
    %v299 = vpack.c.b16 %v233, %v230
    %v300 = vpack.c.b16 %v237, %v234
    %v301 = vpack.c.b16 %v238, %v235
    %v302 = vpack.c.b16 %v239, %v236
    %v303 = vpack.c.b16 %v243, %v240
    %v304 = vpack.c.b16 %v244, %v241
    %v305 = vpack.c.b16 %v245, %v242
    %v306 = vpack.c.b16 %v249, %v246
    %v307 = vpack.c.b16 %v250, %v247
    %v308 = vpack.c.b16 %v251, %v248
    %v309 = vpack.c.b16 %v255, %v252
    %v310 = vpack.c.b16 %v256, %v253
    %v311 = vpack.c.b16 %v257, %v254
    %v312 = vpack.c.b16 %v261, %v258
    %v313 = vpack.c.b16 %v262, %v259
    %v314 = vpack.c.b16 %v263, %v260
    %v315 = vpack.c.b16 %v267, %v264
    %v316 = vpack.c.b16 %v268, %v265
    %v317 = vpack.c.b16 %v269, %v266
    %366 = vmatpush.bf16.msra.mxu0 %v291
    %367 = vmatpush.bf16.msra.mxu0 %v288
    %368 = vmatpush.bf16.msra.mxu0 %v285
    %369 = vmatpush.bf16.msra.mxu0 %v282
    %370 = vmatpush.bf16.msra.mxu0 %v279
    %371 = vmatpush.bf16.msra.mxu0 %v276
    %372 = vmatpush.bf16.msra.mxu0 %v273
    %373 = vmatpush.bf16.msra.mxu0 %v270
    %374 = vmatmul.bf16.gmra.mxu0 %v106
    %v375 = vpop.f32.mrf.mxu0
    %v376 = vadd.f32 %v97, %v375
    %v377 = vpop.f32.mrf.mxu0
    %378 = vdwg.mxu0
    %379 = vmatpush.bf16.msra.mxu0 %v315
    %380 = vmatpush.bf16.msra.mxu0 %v312
    %381 = vmatpush.bf16.msra.mxu0 %v309
    %382 = vmatpush.bf16.msra.mxu0 %v306
    %383 = vmatpush.bf16.msra.mxu0 %v303
    %384 = vmatpush.bf16.msra.mxu0 %v300
    %385 = vmatpush.bf16.msra.mxu0 %v297
    %386 = vmatpush.bf16.msra.mxu0 %v294
    %387 = vmatmul.bf16.gmra.mxu0 %v107
    %v388 = vpop.f32.mrf.mxu0
    %v389 = vadd.f32 %v376, %v388
    %v390 = vpop.f32.mrf.mxu0
    %391 = vdwg.mxu0
    %392 = vmatpush.bf16.msra.mxu0 %v292
    %393 = vmatpush.bf16.msra.mxu0 %v289
    %394 = vmatpush.bf16.msra.mxu0 %v286
    %395 = vmatpush.bf16.msra.mxu0 %v283
    %396 = vmatpush.bf16.msra.mxu0 %v280
    %397 = vmatpush.bf16.msra.mxu0 %v277
    %398 = vmatpush.bf16.msra.mxu0 %v274
    %399 = vmatpush.bf16.msra.mxu0 %v271
    %400 = vmatmul.bf16.gmra.mxu0 %v106
    %v401 = vpop.f32.mrf.mxu0
    %v402 = vadd.f32 %v98, %v401
    %v403 = vpop.f32.mrf.mxu0
    %404 = vdwg.mxu0
    %405 = vmatpush.bf16.msra.mxu0 %v316
    %406 = vmatpush.bf16.msra.mxu0 %v313
    %407 = vmatpush.bf16.msra.mxu0 %v310
    %408 = vmatpush.bf16.msra.mxu0 %v307
    %409 = vmatpush.bf16.msra.mxu0 %v304
    %410 = vmatpush.bf16.msra.mxu0 %v301
    %411 = vmatpush.bf16.msra.mxu0 %v298
    %412 = vmatpush.bf16.msra.mxu0 %v295
    %413 = vmatmul.bf16.gmra.mxu0 %v107
    %v414 = vpop.f32.mrf.mxu0
    %v415 = vadd.f32 %v402, %v414
    %v416 = vpop.f32.mrf.mxu0
    %417 = vdwg.mxu0
    %418 = vmatpush.bf16.msra.mxu0 %v293
    %419 = vmatpush.bf16.msra.mxu0 %v290
    %420 = vmatpush.bf16.msra.mxu0 %v287
    %421 = vmatpush.bf16.msra.mxu0 %v284
    %422 = vmatpush.bf16.msra.mxu0 %v281
    %423 = vmatpush.bf16.msra.mxu0 %v278
    %424 = vmatpush.bf16.msra.mxu0 %v275
    %425 = vmatpush.bf16.msra.mxu0 %v272
    %426 = vmatmul.bf16.gmra.mxu0 %v106
    %v427 = vpop.f32.mrf.mxu0
    %v428 = vadd.f32 %v99, %v427
    %v429 = vpop.f32.mrf.mxu0
    %430 = vdwg.mxu0
    %431 = vmatpush.bf16.msra.mxu0 %v317
    %432 = vmatpush.bf16.msra.mxu0 %v314
    %433 = vmatpush.bf16.msra.mxu0 %v311
    %434 = vmatpush.bf16.msra.mxu0 %v308
    %435 = vmatpush.bf16.msra.mxu0 %v305
    %436 = vmatpush.bf16.msra.mxu0 %v302
    %437 = vmatpush.bf16.msra.mxu0 %v299
    %438 = vmatpush.bf16.msra.mxu0 %v296
    %439 = vmatmul.bf16.gmra.mxu0 %v107
    %v440 = vpop.f32.mrf.mxu0
    %v441 = vadd.f32 %v428, %v440
    %v442 = vpop.f32.mrf.mxu0
    %443 = vdwg.mxu0
    %v444 = vadd.f32 %v389, 1.0
    %v445 = vxor.u32 %v444, 2147483648
    %v446 = vmul.f32 %v445, 1.442695
    %v447 = vpow.pop %v446
    %v448 = vadd.f32 %v447, 1.0
    %v449 = vrcp.pop %v448
    %v450 = vmul.f32 %v448, %v449
    %v451 = vsub.f32 1.0, %v450
    %v452 = vmul.f32 %v449, %v451
    %v453 = vadd.f32 %v449, %v452
    %vm454 = vweird.f32 %v448
    %vm455 = vweird.f32 %v449
    %vm456 = vmor %vm454, %vm455
    %v457 = vsel %vm456, %v449, %v453
    %v458 = vand.u32 2147483647, %v448
    %vm459 = vcmp.eq.f32.partialorder %v458, 8.507059e+37
    %v460 = vand.u32 %v448, 2147483648
    %v461 = vor.u32 1.1754944e-38, %v460
    %v462 = vsel %vm459, %v461, %v457
    %v463 = vmul.f32 1.0, %v462
    %v464 = vsub.f32 1.0, %v463
    %v465 = vxor.u32 %v415, 2147483648
    %v466 = vmul.f32 %v465, 1.442695
    %v467 = vpow.pop %v466
    %v468 = vadd.f32 %v467, 1.0
    %v469 = vrcp.pop %v468
    %v470 = vmul.f32 %v468, %v469
    %v471 = vsub.f32 1.0, %v470
    %v472 = vmul.f32 %v469, %v471
    %v473 = vadd.f32 %v469, %v472
    %vm474 = vweird.f32 %v468
    %vm475 = vweird.f32 %v469
    %vm476 = vmor %vm474, %vm475
    %v477 = vsel %vm476, %v469, %v473
    %v478 = vand.u32 2147483647, %v468
    %vm479 = vcmp.eq.f32.partialorder %v478, 8.507059e+37
    %v480 = vand.u32 %v468, 2147483648
    %v481 = vor.u32 1.1754944e-38, %v480
    %v482 = vsel %vm479, %v481, %v477
    %v483 = vmul.f32 1.0, %v482
    %v484 = vtanh.pop %v441
    %v485 = vld [vmem:[%s2] sm:$0xff]
    %v486 = vmul.f32 %v463, %v485
    %v487 = vmul.f32 %v464, %v484
    %v488 = vadd.f32 %v486, %v487
    %v489 = vtanh.pop %v488
    %v490 = vmul.f32 %v483, %v489
    %491 = vst [vmem:[#allocation5] sm:$0xff] %v488
    %492 = vst [vmem:[#allocation3] sm:$0xff] %v490
    // Predicated region
    $region22: #{lstm_cell_forward.1} parent=1 // pred_check
      _
    $region23: #{lstm_cell_forward.1} parent=1 // pred_check_branch
      %494 = sbr.rel (0) target = $region25
    $region24: #{lstm_cell_forward.1} parent=1 // pred_region
      %496 = vsyncadd [#allocation4], 0
      %s498 = sshll.u32 [#allocation3], 4
      %s499 = int_to_ptr.vmem [resolvable:$true] %s498
      %s500 = sshll.u32 %s5, 4
      %s501 = int_to_ptr.hbm [resolvable:$true] %s500
      %503 = dma.vmem_to_hbm [thread:$0]  %s499, 128, %s501, [#allocation4]
    $region25: #{lstm_cell_forward.1} parent=1 // pred_fallthru
      _
    // Predicated region
    $region26: #{lstm_cell_forward.1} parent=1 // pred_check
      _
    $region27: #{lstm_cell_forward.1} parent=1 // pred_check_branch
      %505 = sbr.rel (0) target = $region29
    $region28: #{lstm_cell_forward.1} parent=1 // pred_region
      %507 = vsyncadd [#allocation6], 0
      %s509 = sshll.u32 [#allocation5], 4
      %s510 = int_to_ptr.vmem [resolvable:$true] %s509
      %s511 = sshll.u32 %s6, 4
      %s512 = int_to_ptr.hbm [resolvable:$true] %s511
      %514 = dma.vmem_to_hbm [thread:$0]  %s510, 128, %s512, [#allocation6]
    $region29: #{lstm_cell_forward.1} parent=1 // pred_fallthru
      _
    // Predicated region
    $region30: #{lstm_cell_forward.1} parent=1 // pred_check
      _
    $region31: #{lstm_cell_forward.1} parent=1 // pred_check_branch
      %516 = sbr.rel (0) target = $region33
    $region32: #{lstm_cell_forward.1} parent=1 // pred_region
      %518 = dma.done [#allocation4], 128
    $region33: #{lstm_cell_forward.1} parent=1 // pred_fallthru
      _
    // Predicated region
    $region34: #{lstm_cell_forward.1} parent=1 // pred_check
      _
    $region35: #{lstm_cell_forward.1} parent=1 // pred_check_branch
      %520 = sbr.rel (0) target = $region37
    $region36: #{lstm_cell_forward.1} parent=1 // pred_region
      %522 = dma.done [#allocation6], 128
    $region37: #{lstm_cell_forward.1} parent=1 // pred_fallthru
      _
    %523 = vsyncpa [#allocation4], 1
    %524 = vsyncpa [#allocation6], 1

</llo_original>
